<compile_context>
chip_gen: v6e
topology: v6e:2x2x1
jax: 0.10.0
libtpu: 0.0.40
codegen_flags: <defaults>
</compile_context>

<pallas_src>
import functools

import jax
import jax.numpy as jnp
from jax.experimental import pallas as pl
from jax.experimental.pallas import tpu as pltpu


def _combiner_kernel(z_ref, h_ref, w1_ref, b1_ref, wh_ref, bh_ref, out_ref):
    z_dim = out_ref.shape[1] // 2

    # lin_z_to_hidden (MXU, operands in native dtype, f32 accumulation) + tanh,
    # then combine with the RNN hidden state.  Elementwise math stays f32.
    pre_hidden = (
        jnp.dot(z_ref[...], w1_ref[...], preferred_element_type=jnp.float32)
        + b1_ref[...].astype(jnp.float32)
    )
    h_combined = 0.5 * (jnp.tanh(pre_hidden) + h_ref[...].astype(jnp.float32))

    # Fused heads: one GEMM producing [loc || scale_pre] (lane-dense 2*z_dim).
    heads = (
        jnp.dot(h_combined.astype(wh_ref.dtype), wh_ref[...],
                preferred_element_type=jnp.float32)
        + bh_ref[...].astype(jnp.float32)
    )

    # Softplus applied to the scale half via a column-mask select (no lane
    # slicing/concat needed; loc and scale share a 128-lane vreg at these
    # widths).  PyTorch default: beta=1, threshold=20 -> identity above 20.
    sp = jnp.where(heads > 20.0, heads, jnp.log1p(jnp.exp(heads)))
    col = jax.lax.broadcasted_iota(jnp.int32, heads.shape, 1)
    out = jnp.where(col >= z_dim, sp, heads)

    out_ref[...] = out.astype(out_ref.dtype)


def _round_up(x, m):
    return (x + m - 1) // m * m


@functools.partial(jax.jit, static_argnames=("block_rows",))
def combiner_forward(z_t_1, h_rnn, params, *, block_rows=512):
    """z_t_1: (B, z_dim), h_rnn: (B, rnn_dim).

    params: dict with w1 (z_dim, rnn_dim), b1 (1, rnn_dim),
            wloc/wscale (rnn_dim, z_dim), bloc/bscale (1, z_dim)
            (weights pre-transposed so the kernel does x @ W + b).
    Returns (loc, scale), each (B, z_dim).
    """
    B, z_dim = z_t_1.shape
    _, rnn_dim = h_rnn.shape

    # Fuse the two heads into one GEMM: (rnn_dim, 2*z_dim) / (1, 2*z_dim).
    w_heads = jnp.concatenate([params["wloc"], params["wscale"]], axis=1)
    b_heads = jnp.concatenate([params["bloc"], params["bscale"]], axis=1)

    # Row tile: large enough to pipeline, clamped (8-aligned) for small B.
    tm = min(block_rows, _round_up(B, 8))
    b_padded = _round_up(B, tm)
    if b_padded != B:
        pad = b_padded - B
        z_t_1 = jnp.pad(z_t_1, ((0, pad), (0, 0)))
        h_rnn = jnp.pad(h_rnn, ((0, pad), (0, 0)))

    grid = (b_padded // tm,)
    out_dtype = z_t_1.dtype

    def row_spec(d):
        return pl.BlockSpec((tm, d), lambda i: (i, 0))

    def resident(shape):  # constant index map -> stays in VMEM across the grid
        return pl.BlockSpec(shape, lambda i: (0, 0))

    fused = pl.pallas_call(
        _combiner_kernel,
        out_shape=jax.ShapeDtypeStruct((b_padded, 2 * z_dim), out_dtype),
        grid=grid,
        in_specs=[
            row_spec(z_dim),                  # z_t_1
            row_spec(rnn_dim),                # h_rnn
            resident((z_dim, rnn_dim)),       # w1
            resident((1, rnn_dim)),           # b1
            resident((rnn_dim, 2 * z_dim)),   # fused head weights
            resident((1, 2 * z_dim)),         # fused head biases
        ],
        out_specs=row_spec(2 * z_dim),        # lane-dense [loc || scale] slab
        compiler_params=pltpu.CompilerParams(
            dimension_semantics=("parallel",)),
    )(z_t_1, h_rnn, params["w1"], params["b1"], w_heads, b_heads)

    fused = fused[:B]
    return fused[:, :z_dim], fused[:, z_dim:]


def init_combiner_params(key, z_dim, rnn_dim, dtype=jnp.float32):
    """Deterministic init mimicking nn.Linear's U(-1/sqrt(fan_in), 1/sqrt(fan_in))."""
    ks = jax.random.split(key, 6)

    def lin(kw, kb, fan_in, fan_out):
        bound = 1.0 / jnp.sqrt(fan_in)
        w = jax.random.uniform(kw, (fan_in, fan_out), dtype, -bound, bound)
        b = jax.random.uniform(kb, (1, fan_out), dtype, -bound, bound)
        return w, b

    w1, b1 = lin(ks[0], ks[1], z_dim, rnn_dim)
    wloc, bloc = lin(ks[2], ks[3], rnn_dim, z_dim)
    wscale, bscale = lin(ks[4], ks[5], rnn_dim, z_dim)
    return dict(w1=w1, b1=b1, wloc=wloc, bloc=bloc, wscale=wscale, bscale=bscale)


def combiner_reference(z_t_1, h_rnn, p):
    """Pure-JAX reference for correctness checks."""
    h_combined = 0.5 * (jnp.tanh(z_t_1 @ p["w1"] + p["b1"]) + h_rnn)
    loc = h_combined @ p["wloc"] + p["bloc"]
    scale = jax.nn.softplus(h_combined @ p["wscale"] + p["bscale"])
    return loc, scale


if __name__ == "__main__":
    z_dim, rnn_dim = 32, 64
    key = jax.random.PRNGKey(0)
    kz, kh, kp = jax.random.split(key, 3)
    params = init_combiner_params(kp, z_dim, rnn_dim)

    # 1) Small per-timestep call (matches the module's typical use).
    B = 8
    z_t_1 = jax.random.normal(kz, (B, z_dim), jnp.float32)
    h_rnn = jax.random.normal(kh, (B, rnn_dim), jnp.float32)
    loc, scale = combiner_forward(z_t_1, h_rnn, params)
    jax.block_until_ready((loc, scale))

    loc_ref, scale_ref = combiner_reference(z_t_1, h_rnn, params)
    assert loc.shape == (B, z_dim) and scale.shape == (B, z_dim)
    assert jnp.allclose(loc, loc_ref, atol=1e-5, rtol=1e-5)
    assert jnp.allclose(scale, scale_ref, atol=1e-5, rtol=1e-5)
    assert bool(jnp.all(scale > 0))

    # 2) Batched (time*batch flattened) call exercising the tiled/parallel
    #    grid path, with a row count that is NOT a multiple of the tile.
    Bt = 300
    zb = jax.random.normal(jax.random.PRNGKey(1), (Bt, z_dim), jnp.float32)
    hb = jax.random.normal(jax.random.PRNGKey(2), (Bt, rnn_dim), jnp.float32)
    locb, scaleb = combiner_forward(zb, hb, params, block_rows=128)
    jax.block_until_ready((locb, scaleb))

    locb_ref, scaleb_ref = combiner_reference(zb, hb, params)
    assert locb.shape == (Bt, z_dim) and scaleb.shape == (Bt, z_dim)
    assert jnp.allclose(locb, locb_ref, atol=1e-5, rtol=1e-5)
    assert jnp.allclose(scaleb, scaleb_ref, atol=1e-5, rtol=1e-5)
    assert bool(jnp.all(scaleb > 0))

    print("KERNEL_OK")
</pallas_src>

<mosaic_0001>
module attributes {stable_mosaic.version = 11 : i64} {
  func.func @_combiner_kernel(%arg0: i32, %arg1: memref<8x32xf32, #tpu.memory_space<vmem>>, %arg2: memref<8x64xf32, #tpu.memory_space<vmem>>, %arg3: memref<32x64xf32, #tpu.memory_space<vmem>>, %arg4: memref<1x64xf32, #tpu.memory_space<vmem>>, %arg5: memref<64x64xf32, #tpu.memory_space<vmem>>, %arg6: memref<1x64xf32, #tpu.memory_space<vmem>>, %arg7: memref<8x64xf32, #tpu.memory_space<vmem>>) attributes {dimension_semantics = [#tpu.dimension_semantics<parallel>], iteration_bounds = array<i64: 1>, scalar_prefetch = 0 : i64, scratch_operands = 0 : i64, tpu.core_type = #tpu.core_type<tc>, window_params = [{transform_indices = @transform_0, window_bounds = array<i64: 8, 32>}, {transform_indices = @transform_1, window_bounds = array<i64: 8, 64>}, {pipeline_mode = #tpu.pipeline_mode<synchronous>, transform_indices = @transform_2, window_bounds = array<i64: 32, 64>}, {pipeline_mode = #tpu.pipeline_mode<synchronous>, transform_indices = @transform_3, window_bounds = array<i64: 1, 64>}, {pipeline_mode = #tpu.pipeline_mode<synchronous>, transform_indices = @transform_4, window_bounds = array<i64: 64, 64>}, {pipeline_mode = #tpu.pipeline_mode<synchronous>, transform_indices = @transform_5, window_bounds = array<i64: 1, 64>}, {transform_indices = @transform_6, window_bounds = array<i64: 8, 64>}]} {
    %c0 = arith.constant 0 : index
    %c0_0 = arith.constant 0 : index
    %0 = vector.load %arg1[%c0, %c0_0] : memref<8x32xf32, #tpu.memory_space<vmem>>, vector<8x32xf32>
    %c0_1 = arith.constant 0 : index
    %c0_2 = arith.constant 0 : index
    %1 = vector.load %arg3[%c0_1, %c0_2] : memref<32x64xf32, #tpu.memory_space<vmem>>, vector<32x64xf32>
    %cst = arith.constant dense<0.000000e+00> : vector<8x64xf32>
    %2 = tpu.matmul %0, %1, %cst {dimension_numbers = #tpu.dot_dimension_numbers<[1], [0], [0], [1], [0, 0, 1, 1], [], []>} : vector<8x32xf32>, vector<32x64xf32>, vector<8x64xf32> -> vector<8x64xf32>
    %c0_3 = arith.constant 0 : index
    %c0_4 = arith.constant 0 : index
    %3 = vector.load %arg4[%c0_3, %c0_4] : memref<1x64xf32, #tpu.memory_space<vmem>>, vector<1x64xf32>
    %4 = vector.broadcast %3 : vector<1x64xf32> to vector<8x64xf32>
    %5 = arith.addf %2, %4 : vector<8x64xf32>
    %6 = math.tanh %5 : vector<8x64xf32>
    %c0_5 = arith.constant 0 : index
    %c0_6 = arith.constant 0 : index
    %7 = vector.load %arg2[%c0_5, %c0_6] : memref<8x64xf32, #tpu.memory_space<vmem>>, vector<8x64xf32>
    %8 = arith.addf %6, %7 : vector<8x64xf32>
    %cst_7 = arith.constant 5.000000e-01 : f32
    %9 = vector.broadcast %cst_7 : f32 to vector<8x64xf32>
    %10 = arith.mulf %9, %8 : vector<8x64xf32>
    %c0_8 = arith.constant 0 : index
    %c0_9 = arith.constant 0 : index
    %11 = vector.load %arg5[%c0_8, %c0_9] : memref<64x64xf32, #tpu.memory_space<vmem>>, vector<64x64xf32>
    %cst_10 = arith.constant dense<0.000000e+00> : vector<8x64xf32>
    %12 = tpu.matmul %10, %11, %cst_10 {dimension_numbers = #tpu.dot_dimension_numbers<[1], [0], [0], [1], [0, 0, 1, 1], [], []>} : vector<8x64xf32>, vector<64x64xf32>, vector<8x64xf32> -> vector<8x64xf32>
    %c0_11 = arith.constant 0 : index
    %c0_12 = arith.constant 0 : index
    %13 = vector.load %arg6[%c0_11, %c0_12] : memref<1x64xf32, #tpu.memory_space<vmem>>, vector<1x64xf32>
    %14 = vector.broadcast %13 : vector<1x64xf32> to vector<8x64xf32>
    %15 = arith.addf %12, %14 : vector<8x64xf32>
    %cst_13 = arith.constant 2.000000e+01 : f32
    %16 = vector.broadcast %cst_13 : f32 to vector<8x64xf32>
    %17 = arith.cmpf ogt, %15, %16 : vector<8x64xf32>
    %18 = math.exp %15 : vector<8x64xf32>
    %19 = math.log1p %18 : vector<8x64xf32>
    %20 = arith.select %17, %15, %19 : vector<8x64xi1>, vector<8x64xf32>
    %21 = tpu.iota {dimensions = array<i32: 1>} : vector<8x64xi32>
    %c32_i32 = arith.constant 32 : i32
    %22 = vector.broadcast %c32_i32 : i32 to vector<8x64xi32>
    %23 = arith.cmpi sge, %21, %22 : vector<8x64xi32>
    %24 = arith.select %23, %20, %15 : vector<8x64xi1>, vector<8x64xf32>
    %c0_14 = arith.constant 0 : index
    %c0_15 = arith.constant 0 : index
    %25 = vector.load %arg7[%c0_14, %c0_15] : memref<8x64xf32, #tpu.memory_space<vmem>>, vector<8x64xf32>
    tpu.vector_store %arg7[%c0_14, %c0_15], %24 {strides = array<i32>} : memref<8x64xf32, #tpu.memory_space<vmem>>, vector<8x64xf32>,
    return
  }
  func.func @transform_0(%arg0: i32) -> (i32, i32) {
    %c0_i32 = arith.constant 0 : i32
    %c0_i32_0 = arith.constant 0 : i32
    return %arg0, %c0_i32 : i32, i32
  }
  func.func @transform_1(%arg0: i32) -> (i32, i32) {
    %c0_i32 = arith.constant 0 : i32
    %c0_i32_0 = arith.constant 0 : i32
    return %arg0, %c0_i32 : i32, i32
  }
  func.func @transform_2(%arg0: i32) -> (i32, i32) {
    %c0_i32 = arith.constant 0 : i32
    %c0_i32_0 = arith.constant 0 : i32
    %c0_i32_1 = arith.constant 0 : i32
    return %c0_i32, %c0_i32_0 : i32, i32
  }
  func.func @transform_3(%arg0: i32) -> (i32, i32) {
    %c0_i32 = arith.constant 0 : i32
    %c0_i32_0 = arith.constant 0 : i32
    %c0_i32_1 = arith.constant 0 : i32
    return %c0_i32, %c0_i32_0 : i32, i32
  }
  func.func @transform_4(%arg0: i32) -> (i32, i32) {
    %c0_i32 = arith.constant 0 : i32
    %c0_i32_0 = arith.constant 0 : i32
    %c0_i32_1 = arith.constant 0 : i32
    return %c0_i32, %c0_i32_0 : i32, i32
  }
  func.func @transform_5(%arg0: i32) -> (i32, i32) {
    %c0_i32 = arith.constant 0 : i32
    %c0_i32_0 = arith.constant 0 : i32
    %c0_i32_1 = arith.constant 0 : i32
    return %c0_i32, %c0_i32_0 : i32, i32
  }
  func.func @transform_6(%arg0: i32) -> (i32, i32) {
    %c0_i32 = arith.constant 0 : i32
    %c0_i32_0 = arith.constant 0 : i32
    return %arg0, %c0_i32 : i32, i32
  }
}

</mosaic_0001>

<llo_original>
// kernel: combiner_forward.1
$region0: #{combiner_forward.1}
  #allocation0 [shape = 'u32[]', space=smem, size = 0x4, offset = 0x4, fixed_abs, tag = 'smem constant byte address 0x4 - core index']
  #allocation1 [shape = 'u32[144,128]{1,0:T(1,128)}', space=vmem, size = 0x12000, scoped, tag = 'internal scratch']
  %s0 = inlined_call_operand.vmem [shape: f32[8,32], index: 0, kind: input, shape index: {}]
  %s1 = inlined_call_operand.vmem [shape: f32[8,64], index: 1, kind: input, shape index: {}]
  %s2 = inlined_call_operand.vmem [shape: f32[32,64], index: 2, kind: input, shape index: {}]
  %s3 = inlined_call_operand.vmem [shape: f32[1,64], index: 3, kind: input, shape index: {}]
  %s4 = inlined_call_operand.vmem [shape: f32[64,64], index: 4, kind: input, shape index: {}]
  %s5 = inlined_call_operand.vmem [shape: f32[1,64], index: 5, kind: input, shape index: {}]
  %s6 = inlined_call_operand.vmem [shape: f32[8,64], index: 6, kind: output, shape index: {}]
  %s7 = sld [smem:[#allocation0]]
  $region34: #{combiner_forward.1} parent=0
    _
  %s9 = ssub.s32 1, %s7
  %s10 = scalar_select 0, %s9, %s7
  // Predicated region
  $region2: #{combiner_forward.1} parent=0 // pred_check
    _
  $region3: #{combiner_forward.1} parent=0 // pred_check_branch
    %12 = sbr.rel (0) target = $region5
  $region4: #{combiner_forward.1} parent=0 // pred_region
    _
  $region5: #{combiner_forward.1} parent=0 // pred_fallthru
    _
  // Predicated region
  $region6: #{combiner_forward.1} parent=0 // pred_check
    _
  $region7: #{combiner_forward.1} parent=0 // pred_check_branch
    %14 = sbr.rel (0) target = $region9
  $region8: #{combiner_forward.1} parent=0 // pred_region
    _
  $region9: #{combiner_forward.1} parent=0 // pred_fallthru
    _
  // Predicated region
  $region10: #{combiner_forward.1} parent=0 // pred_check
    _
  $region11: #{combiner_forward.1} parent=0 // pred_check_branch
    %16 = sbr.rel (0) target = $region13
  $region12: #{combiner_forward.1} parent=0 // pred_region
    _
  $region13: #{combiner_forward.1} parent=0 // pred_fallthru
    _
  // Predicated region
  $region14: #{combiner_forward.1} parent=0 // pred_check
    _
  $region15: #{combiner_forward.1} parent=0 // pred_check_branch
    %18 = sbr.rel (0) target = $region17
  $region16: #{combiner_forward.1} parent=0 // pred_region
    _
  $region17: #{combiner_forward.1} parent=0 // pred_fallthru
    _
  // Predicated region
  $region18: #{combiner_forward.1} parent=0 // pred_check
    _
  $region19: #{combiner_forward.1} parent=0 // pred_check_branch
    %20 = sbr.rel (0) target = $region21
  $region20: #{combiner_forward.1} parent=0 // pred_region
    _
  $region21: #{combiner_forward.1} parent=0 // pred_fallthru
    _
  // Predicated region
  $region22: #{combiner_forward.1} parent=0 // pred_check
    _
  $region23: #{combiner_forward.1} parent=0 // pred_check_branch
    %22 = sbr.rel (0) target = $region25
  $region24: #{combiner_forward.1} parent=0 // pred_region
    _
  $region25: #{combiner_forward.1} parent=0 // pred_fallthru
    _
  %v23 = vld [vmem:[%s0] sm:$0xff]
  %v24 = vld [vmem:[%s2] sm:$0xff]
  %v25 = vld [vmem:[%s2 + $0x8] sm:$0xff]
  %v26 = vld [vmem:[%s2 + $0x10] sm:$0xff]
  %v27 = vld [vmem:[%s2 + $0x18] sm:$0xff]
  %v28 = vld [vmem:[%s3] sm:$0x1]
  %v30 = vlaneseq
  %v31 = vshrl.u32 %v30, 7
  %v32 = vsub.s32 0, %v31
  %v33 = vrot.slane %v28, %v32
  %vm35 = vcmask 261120
  %v37 = vsel %vm35, %v23, 0
  %39 = vmatprep.subr.mxu0 0.0
  %40 = vmatpush1.msra.mxu0 0.0
  %41 = vmatprep.subr.mxu0 0.0
  %42 = vmatpush1.msra.mxu0 0.0
  %43 = vmatprep.subr.mxu0 0.0
  %44 = vmatpush1.msra.mxu0 0.0
  %45 = vmatprep.subr.mxu0 0.0
  %46 = vmatpush1.msra.mxu0 0.0
  %47 = vmatprep.subr.mxu0 0.0
  %48 = vmatpush1.msra.mxu0 0.0
  %49 = vmatprep.subr.mxu0 0.0
  %50 = vmatpush1.msra.mxu0 0.0
  %51 = vmatprep.subr.mxu0 0.0
  %52 = vmatpush1.msra.mxu0 0.0
  %53 = vmatprep.subr.mxu0 0.0
  %54 = vmatpush1.msra.mxu0 0.0
  %55 = vmatprep.subr.mxu0 0.0
  %56 = vmatpush1.msra.mxu0 0.0
  %57 = vmatprep.subr.mxu0 0.0
  %58 = vmatpush1.msra.mxu0 0.0
  %59 = vmatprep.subr.mxu0 0.0
  %60 = vmatpush1.msra.mxu0 0.0
  %61 = vmatprep.subr.mxu0 0.0
  %62 = vmatpush1.msra.mxu0 0.0
  %63 = vmatprep.subr.mxu0 0.0
  %64 = vmatpush1.msra.mxu0 %v27
  %65 = vmatprep.subr.mxu0 0.0
  %66 = vmatpush1.msra.mxu0 %v26
  %67 = vmatprep.subr.mxu0 0.0
  %68 = vmatpush1.msra.mxu0 %v25
  %69 = vmatprep.subr.mxu0 0.0
  %70 = vmatpush1.msra.mxu0 %v24
  %71 = vmatprep.subr.mxu0 0.0
  %72 = vmatpush2.msra.mxu0 0.0
  %73 = vmatprep.subr.mxu0 0.0
  %74 = vmatpush2.msra.mxu0 0.0
  %75 = vmatprep.subr.mxu0 0.0
  %76 = vmatpush2.msra.mxu0 0.0
  %77 = vmatprep.subr.mxu0 0.0
  %78 = vmatpush2.msra.mxu0 0.0
  %79 = vmatprep.subr.mxu0 0.0
  %80 = vmatpush2.msra.mxu0 0.0
  %81 = vmatprep.subr.mxu0 0.0
  %82 = vmatpush2.msra.mxu0 0.0
  %83 = vmatprep.subr.mxu0 0.0
  %84 = vmatpush2.msra.mxu0 0.0
  %85 = vmatprep.subr.mxu0 0.0
  %86 = vmatpush2.msra.mxu0 0.0
  %87 = vmatprep.subr.mxu0 0.0
  %88 = vmatpush2.msra.mxu0 0.0
  %89 = vmatprep.subr.mxu0 0.0
  %90 = vmatpush2.msra.mxu0 0.0
  %91 = vmatprep.subr.mxu0 0.0
  %92 = vmatpush2.msra.mxu0 0.0
  %93 = vmatprep.subr.mxu0 0.0
  %94 = vmatpush2.msra.mxu0 0.0
  %95 = vmatprep.subr.mxu0 0.0
  %96 = vmatpush2.msra.mxu0 0.0
  %97 = vmatprep.subr.mxu0 0.0
  %98 = vmatpush2.msra.mxu0 0.0
  %99 = vmatprep.subr.mxu0 0.0
  %100 = vmatpush2.msra.mxu0 0.0
  %101 = vmatprep.subr.mxu0 0.0
  %102 = vmatpush2.msra.mxu0 0.0
  %103 = vmatprep.mubr.f32.mxu0 0.0
  %104 = vmatmul.mubr.f32.gmra.mxu0 %v37
  %v105 = vpop.f32.mrf.mxu0
  %v106 = vadd.f32 %v33, %v105
  %v107 = vpop.f32.mrf.mxu0
  %108 = vdwg.mxu0
  %v109 = vtanh.pop %v106
  %v110 = vld [vmem:[%s1] sm:$0xff]
  %v111 = vadd.f32 %v109, %v110
  %v112 = vmul.f32 %v111, 0.5
  %v113 = vld [vmem:[%s4] sm:$0xff]
  %v114 = vld [vmem:[%s4 + $0x8] sm:$0xff]
  %v115 = vld [vmem:[%s4 + $0x10] sm:$0xff]
  %v116 = vld [vmem:[%s4 + $0x18] sm:$0xff]
  %v117 = vld [vmem:[%s4 + $0x20] sm:$0xff]
  %v118 = vld [vmem:[%s4 + $0x28] sm:$0xff]
  %v119 = vld [vmem:[%s4 + $0x30] sm:$0xff]
  %v120 = vld [vmem:[%s4 + $0x38] sm:$0xff]
  %v121 = vld [vmem:[%s5] sm:$0x1]
  %v123 = vlaneseq
  %v124 = vshrl.u32 %v123, 7
  %v125 = vsub.s32 0, %v124
  %v126 = vrot.slane %v121, %v125
  %vm128 = vcmask 523264
  %v130 = vsel %vm128, %v112, 0
  %132 = vmatprep.subr.mxu0 0.0
  %133 = vmatpush1.msra.mxu0 0.0
  %134 = vmatprep.subr.mxu0 0.0
  %135 = vmatpush1.msra.mxu0 0.0
  %136 = vmatprep.subr.mxu0 0.0
  %137 = vmatpush1.msra.mxu0 0.0
  %138 = vmatprep.subr.mxu0 0.0
  %139 = vmatpush1.msra.mxu0 0.0
  %140 = vmatprep.subr.mxu0 0.0
  %141 = vmatpush1.msra.mxu0 0.0
  %142 = vmatprep.subr.mxu0 0.0
  %143 = vmatpush1.msra.mxu0 0.0
  %144 = vmatprep.subr.mxu0 0.0
  %145 = vmatpush1.msra.mxu0 0.0
  %146 = vmatprep.subr.mxu0 0.0
  %147 = vmatpush1.msra.mxu0 0.0
  %148 = vmatprep.subr.mxu0 0.0
  %149 = vmatpush1.msra.mxu0 %v120
  %150 = vmatprep.subr.mxu0 0.0
  %151 = vmatpush1.msra.mxu0 %v119
  %152 = vmatprep.subr.mxu0 0.0
  %153 = vmatpush1.msra.mxu0 %v118
  %154 = vmatprep.subr.mxu0 0.0
  %155 = vmatpush1.msra.mxu0 %v117
  %156 = vmatprep.subr.mxu0 0.0
  %157 = vmatpush1.msra.mxu0 %v116
  %158 = vmatprep.subr.mxu0 0.0
  %159 = vmatpush1.msra.mxu0 %v115
  %160 = vmatprep.subr.mxu0 0.0
  %161 = vmatpush1.msra.mxu0 %v114
  %162 = vmatprep.subr.mxu0 0.0
  %163 = vmatpush1.msra.mxu0 %v113
  %164 = vmatprep.subr.mxu0 0.0
  %165 = vmatpush2.msra.mxu0 0.0
  %166 = vmatprep.subr.mxu0 0.0
  %167 = vmatpush2.msra.mxu0 0.0
  %168 = vmatprep.subr.mxu0 0.0
  %169 = vmatpush2.msra.mxu0 0.0
  %170 = vmatprep.subr.mxu0 0.0
  %171 = vmatpush2.msra.mxu0 0.0
  %172 = vmatprep.subr.mxu0 0.0
  %173 = vmatpush2.msra.mxu0 0.0
  %174 = vmatprep.subr.mxu0 0.0
  %175 = vmatpush2.msra.mxu0 0.0
  %176 = vmatprep.subr.mxu0 0.0
  %177 = vmatpush2.msra.mxu0 0.0
  %178 = vmatprep.subr.mxu0 0.0
  %179 = vmatpush2.msra.mxu0 0.0
  %180 = vmatprep.subr.mxu0 0.0
  %181 = vmatpush2.msra.mxu0 0.0
  %182 = vmatprep.subr.mxu0 0.0
  %183 = vmatpush2.msra.mxu0 0.0
  %184 = vmatprep.subr.mxu0 0.0
  %185 = vmatpush2.msra.mxu0 0.0
  %186 = vmatprep.subr.mxu0 0.0
  %187 = vmatpush2.msra.mxu0 0.0
  %188 = vmatprep.subr.mxu0 0.0
  %189 = vmatpush2.msra.mxu0 0.0
  %190 = vmatprep.subr.mxu0 0.0
  %191 = vmatpush2.msra.mxu0 0.0
  %192 = vmatprep.subr.mxu0 0.0
  %193 = vmatpush2.msra.mxu0 0.0
  %194 = vmatprep.subr.mxu0 0.0
  %195 = vmatpush2.msra.mxu0 0.0
  %196 = vmatprep.mubr.f32.mxu0 0.0
  %197 = vmatmul.mubr.f32.gmra.mxu0 %v130
  %v198 = vpop.f32.mrf.mxu0
  %v199 = vadd.f32 %v126, %v198
  %v200 = vpop.f32.mrf.mxu0
  %201 = vdwg.mxu0
  %vm202 = vcmp.gt.f32.partialorder %v199, 20.0
  %v203 = vmul.f32 %v199, 1.442695
  %v204 = vpow.pop %v203
  %v205 = vadd.f32 %v204, 1.0
  %v206 = vlog2.pop %v205
  %v207 = vmul.f32 %v206, 0.6931472
  %v208 = vmul.f32 -0.5, %v204
  %v209 = vadd.f32 %v208, 1.0
  %v210 = vmul.f32 %v209, %v204
  %v211 = vand.u32 2147483647, %v204
  %vm212 = vcmp.lt.f32.partialorder %v211, 0.0004427343
  %v213 = vsel %vm212, %v210, %v207
  %v214 = vsel %vm202, %v199, %v213
  %v215 = vlaneseq
  %v216 = vand.u32 %v215, 127
  %vm217 = vcmp.ge.s32.totalorder %v216, 32
  %v218 = vsel %vm217, %v214, %v199
  %219 = vst.msk [vmem:[%s6] sm:$0xff] %vm128, %v218
  // Predicated region
  $region26: #{combiner_forward.1} parent=0 // pred_check
    _
  $region27: #{combiner_forward.1} parent=0 // pred_check_branch
    %221 = sbr.rel (0) target = $region29
  $region28: #{combiner_forward.1} parent=0 // pred_region
    _
  $region29: #{combiner_forward.1} parent=0 // pred_fallthru
    _
  // Predicated region
  $region30: #{combiner_forward.1} parent=0 // pred_check
    _
  $region31: #{combiner_forward.1} parent=0 // pred_check_branch
    %223 = sbr.rel (0) target = $region33
  $region32: #{combiner_forward.1} parent=0 // pred_region
    _
  $region33: #{combiner_forward.1} parent=0 // pred_fallthru
    _

</llo_original>
